<compile_context>
chip_gen: v5e
topology: v5e:2x2
jax: 0.10.0
libtpu: 0.0.40
codegen_flags: <defaults>
</compile_context>

<pallas_src>
import functools

import jax
import jax.numpy as jnp
from jax import lax
from jax.experimental import pallas as pl
from jax.experimental.pallas import tpu as pltpu


def _project_kernel(h_ref, w_ref, a_ref, z_ref, s_ref):
    """z = h @ W_all (bf16 out) ;  scores_T = A_fold @ h^T (src nodes on the lane axis)."""
    h = h_ref[...]                                                  # (tm, in_dim) bf16
    z_ref[...] = jnp.dot(h, w_ref[...],
                         preferred_element_type=jnp.float32).astype(z_ref.dtype)
    # scores_T[j, u]: j in [0,H) -> s_src head j ; j in [H,2H) -> s_dst_pre head j-H
    s_ref[...] = lax.dot_general(a_ref[...], h, (((1,), (1,)), ((), ())),
                                 preferred_element_type=jnp.float32)  # (2H, tm) f32


def _gat_attention_kernel(*refs, num_heads, negative_slope, use_residual):
    if use_residual:
        z_blk_ref, s_src_ref, s_dst_ref, adj_ref, z_dst_ref, o_ref = refs
    else:
        z_blk_ref, s_src_ref, s_dst_ref, adj_ref, o_ref = refs
        z_dst_ref = None

    s_src = s_src_ref[...]                            # (H, n_src)  f32
    s_dst = s_dst_ref[...]                            # (td, H)     f32 (pre-gathered)
    edge_mask = adj_ref[...] > 0                      # (td, n_src) bool

    # Per-head masked softmax.  Elementwise/exp kept in f32 for reference parity.
    # TODO(synk): bf16 exp/leaky-relu path on v6e/v7x (EUP/VPU are bf16 there).
    alphas = []
    for hd in range(num_heads):
        e = s_dst[:, hd:hd + 1] + s_src[hd:hd + 1, :]              # (td, n_src)
        e = jnp.where(e > 0, e, negative_slope * e)                # leaky_relu
        masked = jnp.where(edge_mask, e, -1e30)
        m = jnp.max(masked, axis=-1, keepdims=True)
        p = jnp.exp(masked - m)                                    # non-edges -> 0
        denom = jnp.sum(p, axis=-1, keepdims=True)
        alphas.append(p * pl.reciprocal(denom, approx=True))

    # Single lane-dense MXU matmul against the block-diagonal z: directly yields the
    # concatenated (td, H*out_dim) head outputs (no unaligned z slices, no head concat).
    alpha_cat = jnp.concatenate(alphas, axis=1).astype(jnp.bfloat16)   # (td, H*n_src)
    acc = jnp.dot(alpha_cat, z_blk_ref[...],
                  preferred_element_type=jnp.float32)                  # (td, H*out)
    if use_residual:
        acc = acc + z_dst_ref[...]
    o_ref[...] = acc.astype(o_ref.dtype)


def _round_up(x, m):
    return ((x + m - 1) // m) * m


def multi_head_gat(h_src, w, a_src, a_dst, adj, indices, *, merge="cat",
                   use_residual=False, negative_slope=0.01):
    num_heads, in_dim, out_dim = w.shape
    n_src = h_src.shape[0]
    n_dst = adj.shape[0]
    ho = num_heads * out_dim

    # --- tiny parameter folding (O(H*in*out), once per call); bf16 MXU operands ---
    w_all = jnp.transpose(w, (1, 0, 2)).reshape(in_dim, ho).astype(jnp.bfloat16)
    a_fold = jnp.concatenate(
        [jnp.einsum("hio,ho->hi", w, a_src),
         jnp.einsum("hio,ho->hi", w, a_dst)], axis=0).astype(jnp.bfloat16)   # (2H, in)
    h_bf = h_src.astype(jnp.bfloat16)

    # --- kernel 1: shared projection for all heads, tiled over source rows ---
    tm = n_src if n_src <= 512 else 512
    grid_src = pl.cdiv(n_src, tm)
    k1_block_bytes = (tm * in_dim * 2 + in_dim * ho * 2 + 2 * num_heads * in_dim * 2
                      + tm * ho * 2 + 2 * num_heads * tm * 4)
    vmem1 = int(min(96 << 20, max(32 << 20, 3 * k1_block_bytes + (8 << 20))))

    z_all, scores = pl.pallas_call(
        _project_kernel,
        grid=(grid_src,),
        in_specs=[
            pl.BlockSpec((tm, in_dim), lambda i: (i, 0)),
            pl.BlockSpec((in_dim, ho), lambda i: (0, 0)),
            pl.BlockSpec((2 * num_heads, in_dim), lambda i: (0, 0)),
        ],
        out_specs=(
            pl.BlockSpec((tm, ho), lambda i: (i, 0)),
            pl.BlockSpec((2 * num_heads, tm), lambda i: (0, i)),
        ),
        out_shape=(
            jax.ShapeDtypeStruct((n_src, ho), jnp.bfloat16),
            jax.ShapeDtypeStruct((2 * num_heads, n_src), jnp.float32),
        ),
        compiler_params=pltpu.CompilerParams(
            dimension_semantics=("parallel",), vmem_limit_bytes=vmem1),
    )(h_bf, w_all, a_fold)

    # --- wrapper-side layout plumbing (tiny XLA ops, hoisted out of the kernel) ---
    s_src_rows = scores[:num_heads]                                   # (H, n_src) f32
    s_dst = jnp.take(scores[num_heads:], indices, axis=1).T           # (n_dst, H) f32
    # block-diagonal z so one lane-dense matmul emits the concatenated head outputs
    z_heads = jnp.transpose(z_all.reshape(n_src, num_heads, out_dim), (1, 0, 2))
    eye = jnp.eye(num_heads, dtype=z_all.dtype)
    z_blk = (z_heads[:, :, None, :] * eye[:, None, :, None]).reshape(
        num_heads * n_src, ho)                                        # (H*n_src, ho) bf16

    # --- kernel 2: attention + masked softmax + aggregation, tiled over dst nodes ---
    if n_dst <= 64:
        tile_dst = n_dst        # full-dim block; sidesteps sub-32-bit sublane tiling limits
    else:
        tile_dst = min(256, _round_up(pl.cdiv(n_dst, 2), 32))         # grid >= 2 (megacore)
    grid_dst = pl.cdiv(n_dst, tile_dst)

    # adj only feeds a >0 compare: stream as int8 when the tile shape allows it.
    use_int8 = (tile_dst % 32 == 0) and (n_src % 128 == 0)
    adj_in = adj.astype(jnp.int8 if use_int8 else jnp.bfloat16)

    kernel = functools.partial(
        _gat_attention_kernel,
        num_heads=int(num_heads),
        negative_slope=float(negative_slope), use_residual=bool(use_residual))

    in_specs = [
        pl.BlockSpec((num_heads * n_src, ho), lambda t: (0, 0)),      # block-diag z (inv.)
        pl.BlockSpec((num_heads, n_src), lambda t: (0, 0)),           # src scores (inv.)
        pl.BlockSpec((tile_dst, num_heads), lambda t: (t, 0)),        # dst scores tile
        pl.BlockSpec((tile_dst, n_src), lambda t: (t, 0)),            # adjacency tile
    ]
    args = [z_blk, s_src_rows, s_dst, adj_in]
    if use_residual:
        z_dst = jnp.take(z_all, indices, axis=0).astype(jnp.float32)  # (n_dst, ho)
        in_specs.append(pl.BlockSpec((tile_dst, ho), lambda t: (t, 0)))
        args.append(z_dst)

    adj_bytes = int(adj_in.size) * adj_in.dtype.itemsize
    cost = pl.CostEstimate(
        flops=int(2 * n_dst * num_heads * n_src * ho + 8 * num_heads * n_dst * n_src),
        transcendentals=int(num_heads * n_dst * (n_src + 1)),
        bytes_accessed=int(z_blk.size * 2 + scores.size * 4 + s_dst.size * 4
                           + adj_bytes + 4 * n_dst * ho
                           + (4 * n_dst * ho if use_residual else 0)),
    )

    k2_block_bytes = (num_heads * n_src * ho * 2 + num_heads * n_src * 4
                      + tile_dst * num_heads * 4
                      + tile_dst * n_src * adj_in.dtype.itemsize
                      + tile_dst * ho * 4
                      + (tile_dst * ho * 4 if use_residual else 0)
                      + (num_heads + 3) * tile_dst * n_src * 4)       # elementwise temps
    vmem2 = int(min(96 << 20, max(32 << 20, 3 * k2_block_bytes + (8 << 20))))

    out_cat = pl.pallas_call(
        kernel,
        grid=(grid_dst,),
        in_specs=in_specs,
        out_specs=pl.BlockSpec((tile_dst, ho), lambda t: (t, 0)),     # lane-dense concat out
        out_shape=jax.ShapeDtypeStruct((n_dst, ho), jnp.float32),
        compiler_params=pltpu.CompilerParams(
            dimension_semantics=("parallel",), vmem_limit_bytes=vmem2),
        cost_estimate=cost,
    )(*args)

    if merge == "cat":
        return out_cat                                  # already torch.cat(head_outs, dim=1)
    # merge == 'mean'
    return jnp.mean(out_cat.reshape(n_dst, num_heads, out_dim), axis=1)


def _reference(h_src, w, a_src, a_dst, adj, indices, merge, use_residual,
               negative_slope=0.01):
    outs = []
    for hd in range(w.shape[0]):
        z = h_src @ w[hd]
        z_dst = z[indices]
        e = (z_dst @ a_dst[hd])[:, None] + (z @ a_src[hd])[None, :]
        e = jnp.where(e > 0, e, negative_slope * e)
        masked = jnp.where(adj > 0, e, -jnp.inf)
        p = jnp.exp(masked - masked.max(-1, keepdims=True))
        alpha = p / p.sum(-1, keepdims=True)
        ho = alpha @ z
        if use_residual:
            ho = ho + z_dst
        outs.append(ho)
    if merge == "cat":
        return jnp.concatenate(outs, axis=1)
    return jnp.mean(jnp.stack(outs), axis=0)


if __name__ == "__main__":
    key = jax.random.PRNGKey(0)
    in_dim, out_dim, num_heads = 8, 16, 4
    n_src, n_dst = 16, 8

    k1, k2, k3, k4 = jax.random.split(key, 4)

    # Deterministic xavier_normal_ init with gain = calculate_gain('relu') = sqrt(2)
    gain = 2.0 ** 0.5
    fc_std = gain * (2.0 / (in_dim + out_dim)) ** 0.5      # fc.weight (out_dim, in_dim)
    attn_std = gain * (2.0 / (2 * out_dim + 1)) ** 0.5     # attn_fc.weight (1, 2*out_dim)
    w = (fc_std * jax.random.normal(k1, (num_heads, in_dim, out_dim))).astype(jnp.float32)
    a = (attn_std * jax.random.normal(k2, (num_heads, 2 * out_dim))).astype(jnp.float32)
    a_src = a[:, :out_dim]
    a_dst = a[:, out_dim:]

    # source-layer node features ('h')
    h_src = jax.random.normal(k3, (n_src, in_dim), dtype=jnp.float32)

    # NodeFlow block structure: dst node i is parent node i in the source layer
    # (the topk((A==B).int(),1,0) gather); every dst node keeps its self edge so
    # the mailbox is never empty.
    indices = jnp.arange(n_dst, dtype=jnp.int32)
    self_edge = jax.nn.one_hot(indices, n_src, dtype=jnp.float32)
    adj = jnp.maximum((jax.random.uniform(k4, (n_dst, n_src)) < 0.4).astype(jnp.float32),
                      self_edge)

    # The kernels run all MXU matmuls with bf16 operands (f32 accumulation), so the
    # reference is evaluated on the same bf16-rounded h / W; tolerance reflects the
    # remaining bf16 rounding of the folded attention vectors, z_all and alpha.
    hq = h_src.astype(jnp.bfloat16).astype(jnp.float32)
    wq = w.astype(jnp.bfloat16).astype(jnp.float32)

    # merge='cat', no residual (matches MultiHeadGATLayer defaults)
    out = multi_head_gat(h_src, w, a_src, a_dst, adj, indices,
                         merge="cat", use_residual=False)
    out = jax.block_until_ready(out)
    ref = _reference(hq, wq, a_src, a_dst, adj, indices, "cat", False)
    assert out.shape == (n_dst, num_heads * out_dim), out.shape
    assert jnp.allclose(out, ref, atol=3e-2, rtol=3e-2), "mismatch vs reference (cat)"

    # merge='mean' with residual, same kernels
    out2 = jax.block_until_ready(
        multi_head_gat(h_src, w, a_src, a_dst, adj, indices,
                       merge="mean", use_residual=True))
    ref2 = _reference(hq, wq, a_src, a_dst, adj, indices, "mean", True)
    assert out2.shape == (n_dst, out_dim), out2.shape
    assert jnp.allclose(out2, ref2, atol=3e-2, rtol=3e-2), "mismatch vs reference (mean)"

    print("KERNEL_OK")
</pallas_src>

<mosaic_0001>
module attributes {stable_mosaic.version = 11 : i64} {
  func.func @_project_kernel(%arg0: i32, %arg1: memref<16x8xbf16, #tpu.memory_space<vmem>>, %arg2: memref<8x64xbf16, #tpu.memory_space<vmem>>, %arg3: memref<8x8xbf16, #tpu.memory_space<vmem>>, %arg4: memref<16x64xbf16, #tpu.memory_space<vmem>>, %arg5: memref<8x16xf32, #tpu.memory_space<vmem>>) attributes {dimension_semantics = [#tpu.dimension_semantics<parallel>], iteration_bounds = array<i64: 1>, scalar_prefetch = 0 : i64, scratch_operands = 0 : i64, tpu.core_type = #tpu.core_type<tc>, window_params = [{transform_indices = @transform_0, window_bounds = array<i64: 16, 8>}, {pipeline_mode = #tpu.pipeline_mode<synchronous>, transform_indices = @transform_1, window_bounds = array<i64: 8, 64>}, {pipeline_mode = #tpu.pipeline_mode<synchronous>, transform_indices = @transform_2, window_bounds = array<i64: 8, 8>}, {transform_indices = @transform_3, window_bounds = array<i64: 16, 64>}, {transform_indices = @transform_4, window_bounds = array<i64: 8, 16>}]} {
    %c0 = arith.constant 0 : index
    %c0_0 = arith.constant 0 : index
    %0 = vector.load %arg1[%c0, %c0_0] : memref<16x8xbf16, #tpu.memory_space<vmem>>, vector<16x8xbf16>
    %c0_1 = arith.constant 0 : index
    %c0_2 = arith.constant 0 : index
    %1 = vector.load %arg2[%c0_1, %c0_2] : memref<8x64xbf16, #tpu.memory_space<vmem>>, vector<8x64xbf16>
    %cst = arith.constant dense<0.000000e+00> : vector<16x64xf32>
    %2 = tpu.matmul %0, %1, %cst {dimension_numbers = #tpu.dot_dimension_numbers<[1], [0], [0], [1], [0, 0, 1, 1], [], []>} : vector<16x8xbf16>, vector<8x64xbf16>, vector<16x64xf32> -> vector<16x64xf32>
    %3 = arith.truncf %2 : vector<16x64xf32> to vector<16x64xbf16>
    %c0_3 = arith.constant 0 : index
    %c0_4 = arith.constant 0 : index
    %4 = vector.load %arg4[%c0_3, %c0_4] : memref<16x64xbf16, #tpu.memory_space<vmem>>, vector<16x64xbf16>
    tpu.vector_store %arg4[%c0_3, %c0_4], %3 {strides = array<i32>} : memref<16x64xbf16, #tpu.memory_space<vmem>>, vector<16x64xbf16>,
    %c0_5 = arith.constant 0 : index
    %c0_6 = arith.constant 0 : index
    %5 = vector.load %arg3[%c0_5, %c0_6] : memref<8x8xbf16, #tpu.memory_space<vmem>>, vector<8x8xbf16>
    %cst_7 = arith.constant dense<0.000000e+00> : vector<8x16xf32>
    %6 = tpu.matmul %5, %0, %cst_7 {dimension_numbers = #tpu.dot_dimension_numbers<[1], [1], [0], [0], [0, 0, 1, 0], [], []>} : vector<8x8xbf16>, vector<16x8xbf16>, vector<8x16xf32> -> vector<8x16xf32>
    %c0_8 = arith.constant 0 : index
    %c0_9 = arith.constant 0 : index
    %7 = vector.load %arg5[%c0_8, %c0_9] : memref<8x16xf32, #tpu.memory_space<vmem>>, vector<8x16xf32>
    tpu.vector_store %arg5[%c0_8, %c0_9], %6 {strides = array<i32>} : memref<8x16xf32, #tpu.memory_space<vmem>>, vector<8x16xf32>,
    return
  }
  func.func @transform_0(%arg0: i32) -> (i32, i32) {
    %c0_i32 = arith.constant 0 : i32
    %c0_i32_0 = arith.constant 0 : i32
    return %arg0, %c0_i32 : i32, i32
  }
  func.func @transform_1(%arg0: i32) -> (i32, i32) {
    %c0_i32 = arith.constant 0 : i32
    %c0_i32_0 = arith.constant 0 : i32
    %c0_i32_1 = arith.constant 0 : i32
    return %c0_i32, %c0_i32_0 : i32, i32
  }
  func.func @transform_2(%arg0: i32) -> (i32, i32) {
    %c0_i32 = arith.constant 0 : i32
    %c0_i32_0 = arith.constant 0 : i32
    %c0_i32_1 = arith.constant 0 : i32
    return %c0_i32, %c0_i32_0 : i32, i32
  }
  func.func @transform_3(%arg0: i32) -> (i32, i32) {
    %c0_i32 = arith.constant 0 : i32
    %c0_i32_0 = arith.constant 0 : i32
    return %arg0, %c0_i32 : i32, i32
  }
  func.func @transform_4(%arg0: i32) -> (i32, i32) {
    %c0_i32 = arith.constant 0 : i32
    %c0_i32_0 = arith.constant 0 : i32
    return %c0_i32, %arg0 : i32, i32
  }
}

</mosaic_0001>

<llo_original>
// kernel: tpu_custom_call.1
$region0: #{tpu_custom_call.1}
  #allocation0 [shape = 'u32[]', space=smem, size = 0x4, offset = 0x4, fixed_abs, tag = 'smem constant byte address 0x4 - core index']
  #allocation1 [shape = 'u32[72,128]{1,0:T(1,128)}', space=vmem, size = 0x9000, scoped, tag = 'internal scratch']
  %s0 = inlined_call_operand.vmem [shape: bf16[16,8], index: 0, kind: input, shape index: {}]
  %s1 = inlined_call_operand.vmem [shape: bf16[8,64], index: 1, kind: input, shape index: {}]
  %s2 = inlined_call_operand.vmem [shape: bf16[8,8], index: 2, kind: input, shape index: {}]
  %s3 = inlined_call_operand.hbm [shape: bf16[16,64], index: 3, kind: output, shape index: {0}]
  %s4 = inlined_call_operand.hbm [shape: f32[8,16], index: 4, kind: output, shape index: {1}]
  %5 = xla_tuple %s3, %s4
  %s6 = sld [smem:[#allocation0]]
  $region30: #{tpu_custom_call.1} parent=0
    _
  %s8 = ssub.s32 1, %s6
  %s9 = scalar_select 0, %s8, %s6
  $region1: #{tpu_custom_call.1} parent=0
    #allocation2 [shape = 'u8[4096]{0}', space=vmem, size = 0x1000, scoped, tag = 'output window, operand 0, single buffered']
    #allocation3 [shape = 's32[1]{0}', space=sflag, size = 0x4, scoped, tag = 'scoped memory for tpu_custom_call.1']
    #allocation4 [shape = 'u8[4096]{0}', space=vmem, size = 0x1000, scoped, tag = 'output window, operand 1, single buffered']
    #allocation5 [shape = 's32[1]{0}', space=sflag, size = 0x4, scoped, tag = 'scoped memory for tpu_custom_call.1']
    %10 = vsyncpa [#allocation3], 0
    %11 = vsyncpa [#allocation5], 0
    // Predicated region
    $region2: #{tpu_custom_call.1} parent=1 // pred_check
      _
    $region3: #{tpu_custom_call.1} parent=1 // pred_check_branch
      %13 = sbr.rel (0) target = $region5
    $region4: #{tpu_custom_call.1} parent=1 // pred_region
      _
    $region5: #{tpu_custom_call.1} parent=1 // pred_fallthru
      _
    // Predicated region
    $region6: #{tpu_custom_call.1} parent=1 // pred_check
      _
    $region7: #{tpu_custom_call.1} parent=1 // pred_check_branch
      %15 = sbr.rel (0) target = $region9
    $region8: #{tpu_custom_call.1} parent=1 // pred_region
      _
    $region9: #{tpu_custom_call.1} parent=1 // pred_fallthru
      _
    // Predicated region
    $region10: #{tpu_custom_call.1} parent=1 // pred_check
      _
    $region11: #{tpu_custom_call.1} parent=1 // pred_check_branch
      %17 = sbr.rel (0) target = $region13
    $region12: #{tpu_custom_call.1} parent=1 // pred_region
      _
    $region13: #{tpu_custom_call.1} parent=1 // pred_fallthru
      _
    %v19 = vld [vmem:[%s0] sm:$0xf]
    %v20 = vld [vmem:[%s0 + $0x4] sm:$0xf]
    %v21 = vld [vmem:[%s1] sm:$0xf]
    %v24 = vunpack.c.l.b16 %v19
    %v25 = vunpack.c.l.b16 %v20
    %v26 = vpack.c.b16 %v25, %v24
    %vm27 = vcmask 64512
    %v29 = vsel %vm27, %v26, 0
    %vm31 = vcmask 1043456
    %v33 = vsel %vm31, %v21, 0
    %35 = vmatpush.bf16.msra.mxu0 0
    %36 = vmatpush.bf16.msra.mxu0 0
    %37 = vmatpush.bf16.msra.mxu0 0
    %38 = vmatpush.bf16.msra.mxu0 0
    %39 = vmatpush.bf16.msra.mxu0 0
    %40 = vmatpush.bf16.msra.mxu0 0
    %41 = vmatpush.bf16.msra.mxu0 0
    %42 = vmatpush.bf16.msra.mxu0 %v33
    %43 = vmatmul.bf16.gmra.mxu0 %v29
    %v44 = vpop.f32.mrf.mxu0
    %v45 = vadd.f32 0.0, %v44
    %v46 = vpop.f32.mrf.mxu0
    %v47 = vadd.f32 0.0, %v46
    %48 = vdwg.mxu0
    %v49 = vpack.c.bf16 %v45, %v45
    %v50 = vpack.c.bf16 %v47, %v47
    %vm51 = vcmask 519168
    %52 = vst.msk [vmem:[#allocation2] sm:$0xf] %vm51, %v49
    %53 = vst.msk [vmem:[#allocation2 + $0x4] sm:$0xf] %vm51, %v50
    %v54 = vld [vmem:[%s2] sm:$0xf]
    %v56 = vsel %vm27, %v54, 0
    %58 = vmatpush.bf16.xpose.msra.mxu0 0
    %59 = vmatpush.bf16.xpose.msra.mxu0 0
    %60 = vmatpush.bf16.xpose.msra.mxu0 0
    %61 = vmatpush.bf16.xpose.msra.mxu0 0
    %62 = vmatpush.bf16.xpose.msra.mxu0 0
    %63 = vmatpush.bf16.xpose.msra.mxu0 0
    %64 = vmatpush.bf16.xpose.msra.mxu0 0
    %65 = vmatpush.bf16.xpose.msra.mxu0 %v29
    %66 = vmatmul.bf16.gmra.mxu0 %v56
    %v67 = vpop.f32.mrf.mxu0
    %v68 = vadd.f32 0.0, %v67
    %v69 = vpop.f32.mrf.mxu0
    %70 = vdwg.mxu0
    %vm71 = vcmask 130048
    %72 = vst.msk [vmem:[#allocation4] sm:$0xff] %vm71, %v68
    // Predicated region
    $region14: #{tpu_custom_call.1} parent=1 // pred_check
      _
    $region15: #{tpu_custom_call.1} parent=1 // pred_check_branch
      %74 = sbr.rel (0) target = $region17
    $region16: #{tpu_custom_call.1} parent=1 // pred_region
      %76 = vsyncadd [#allocation3], 0
      %s77 = sshll.u32 [#allocation2], 4
      %s78 = int_to_ptr.vmem [resolvable:$true] %s77
      %s79 = sshll.u32 %s3, 4
      %s80 = int_to_ptr.hbm [resolvable:$true] %s79
      %85 = dma.vmem_to_hbm [thread:$0]  %s78, 128, %s80, [#allocation3], 64, 64, 4
    $region17: #{tpu_custom_call.1} parent=1 // pred_fallthru
      _
    // Predicated region
    $region18: #{tpu_custom_call.1} parent=1 // pred_check
      _
    $region19: #{tpu_custom_call.1} parent=1 // pred_check_branch
      %87 = sbr.rel (0) target = $region21
    $region20: #{tpu_custom_call.1} parent=1 // pred_region
      %89 = vsyncadd [#allocation5], 0
      %s91 = sshll.u32 [#allocation4], 4
      %s92 = int_to_ptr.vmem [resolvable:$true] %s91
      %s93 = sshll.u32 %s4, 4
      %s94 = int_to_ptr.hbm [resolvable:$true] %s93
      %96 = dma.vmem_to_hbm [thread:$0]  %s92, 128, %s94, [#allocation5]
    $region21: #{tpu_custom_call.1} parent=1 // pred_fallthru
      _
    // Predicated region
    $region22: #{tpu_custom_call.1} parent=1 // pred_check
      _
    $region23: #{tpu_custom_call.1} parent=1 // pred_check_branch
      %98 = sbr.rel (0) target = $region25
    $region24: #{tpu_custom_call.1} parent=1 // pred_region
      %100 = dma.done [#allocation3], 128
    $region25: #{tpu_custom_call.1} parent=1 // pred_fallthru
      _
    // Predicated region
    $region26: #{tpu_custom_call.1} parent=1 // pred_check
      _
    $region27: #{tpu_custom_call.1} parent=1 // pred_check_branch
      %102 = sbr.rel (0) target = $region29
    $region28: #{tpu_custom_call.1} parent=1 // pred_region
      %104 = dma.done [#allocation5], 128
    $region29: #{tpu_custom_call.1} parent=1 // pred_fallthru
      _
    %105 = vsyncpa [#allocation3], 1
    %106 = vsyncpa [#allocation5], 1

</llo_original>
